<compile_context>
chip_gen: v7x
topology: tpu7x:2x2x1
jax: 0.10.0
libtpu: 0.0.40
codegen_flags: <defaults>
</compile_context>

<pallas_src>
import jax
import jax.numpy as jnp
import numpy as np
from jax.experimental import pallas as pl
from jax.experimental.pallas import tpu as pltpu


# ----------------------------------------------------------------------------
# Primary path: the identity, exactly as the PyTorch module does.
# ----------------------------------------------------------------------------
def no_quantizer_forward(x):
    """Pallas-free equivalent of NoQuantizer.forward: returns x unchanged."""
    return x


# ----------------------------------------------------------------------------
# Secondary path: materialized identity copy as a Pallas kernel.
# ----------------------------------------------------------------------------
def _copy_kernel(x_ref, o_ref):
    # Straight VMEM tile copy: load the whole block, store it unchanged.
    o_ref[...] = x_ref[...]


# Sublane packing multiple per element size (32-bit: 8, 16-bit: 16, 8-bit: 32).
_SUBLANE_MULTIPLE = {4: 8, 2: 16, 1: 32}


def _scoped_vmem_budget_bytes():
    """Byte budget for the live double-buffered (in + out) block working set.

    Conservative: fits comfortably inside v5e's 16 MiB default scoped VMEM,
    so the same tiling works unchanged on v6e (32 MiB default / 128 MiB
    physical) and v7x (32 MiB default / 64 MiB physical).
    """
    budget = 12 << 20
    try:
        info = pltpu.get_tpu_info()
        cap = getattr(info, "vmem_capacity_bytes", None)
        if cap:
            # Never more than 24 MiB of live blocks, never less than 8 MiB.
            budget = int(min(24 << 20, max(8 << 20, cap // 8)))
    except Exception:
        pass
    return budget


def _choose_layout(x):
    """Pick a lane-dense 2-D view and a VMEM-budgeted row tile.

    Returns (xf_2d, tn) where xf_2d is a reshaped view of x and tn is the row
    tile size (multiple of the dtype sublane packing, or the full row count).
    """
    itemsize = jnp.dtype(x.dtype).itemsize
    sub = _SUBLANE_MULTIPLE.get(itemsize, 8)
    total = x.size
    last = x.shape[-1]

    # Lane-density guard: prefer a last dim that is a multiple of 128.
    if last >= 128 and last % 128 == 0:
        xf = x.reshape(-1, last)
    else:
        lane_w = None
        for w in (1024, 512, 256, 128):
            if total % w == 0:
                lane_w = w
                break
        if lane_w is not None:
            xf = x.reshape(-1, lane_w)
        else:
            # Fallback: correctness first (full-extent last dim, masked stores).
            xf = x.reshape(-1, last)

    n_rows, width = xf.shape
    row_bytes = max(1, width * itemsize)

    # Double-buffered input + output blocks must fit the budget:
    #   4 * tn * width * itemsize <= budget
    budget = _scoped_vmem_budget_bytes()
    tn = budget // (4 * row_bytes)
    tn = max(sub, (tn // sub) * sub)
    tn = min(tn, 2048)  # diminishing returns beyond ~1-2k rows (85% -> 86%)

    if tn >= n_rows:
        # Whole array fits in one block.  Prefer >= 2 grid steps so the
        # "parallel" axis can shard across both TensorCores on v7x.
        tn = n_rows
        half = (n_rows + 1) // 2
        half = ((half + sub - 1) // sub) * sub  # keep sublane alignment
        if half < n_rows:
            tn = half
    return xf, tn


def no_quantizer_forward_pallas(x):
    """Materialized identity copy (only if a kernel node is truly required)."""
    if x.ndim == 0 or x.size == 0:
        return x

    orig_shape = x.shape
    xf, tn = _choose_layout(x)
    n_rows, width = xf.shape
    itemsize = jnp.dtype(x.dtype).itemsize
    grid = pl.cdiv(n_rows, tn)  # ragged last block is masked by Pallas

    # Explicit scoped-VMEM limit: plenty of headroom over the 4-buffer working
    # set, but safe on every generation (<= v7x's 32 MiB default).
    working_set = 4 * tn * width * itemsize
    vmem_limit = int(min(64 << 20, max(32 << 20, 2 * working_set)))

    out = pl.pallas_call(
        _copy_kernel,
        out_shape=jax.ShapeDtypeStruct((n_rows, width), xf.dtype),
        grid_spec=pltpu.PrefetchScalarGridSpec(
            num_scalar_prefetch=0,
            grid=(grid,),
            in_specs=[pl.BlockSpec((tn, width), lambda i: (i, 0))],
            out_specs=pl.BlockSpec((tn, width), lambda i: (i, 0)),
        ),
        compiler_params=pltpu.CompilerParams(
            dimension_semantics=("parallel",),
            vmem_limit_bytes=vmem_limit,
        ),
        cost_estimate=pl.CostEstimate(
            flops=0,
            transcendentals=0,
            bytes_accessed=2 * x.size * itemsize,
        ),
    )(xf)
    return out.reshape(orig_shape)


if __name__ == "__main__":
    key = jax.random.PRNGKey(0)

    # Small shapes consistent with a quantizer sitting on activations:
    # batch=2, seq=8, hidden=256.
    B, S, D = 2, 8, 256
    x = jax.random.normal(key, (B, S, D), dtype=jnp.float32)

    # Primary path: identity, no kernel at all.
    y = no_quantizer_forward(x)
    y = jax.block_until_ready(y)
    np.testing.assert_array_equal(np.asarray(y), np.asarray(x))
    assert y.dtype == x.dtype and y.shape == x.shape

    # Secondary path: materialized Pallas identity copy, bit-exact.
    z = no_quantizer_forward_pallas(x)
    z = jax.block_until_ready(z)
    np.testing.assert_array_equal(np.asarray(z), np.asarray(x))
    assert z.dtype == x.dtype and z.shape == x.shape

    # Exercise the lane-density / flatten path with a narrow bf16 last dim.
    x2 = jax.random.normal(key, (2, 8, 32), dtype=jnp.float32).astype(jnp.bfloat16)
    z2 = no_quantizer_forward_pallas(x2)
    z2 = jax.block_until_ready(z2)
    np.testing.assert_array_equal(np.asarray(z2), np.asarray(x2))
    assert z2.dtype == x2.dtype and z2.shape == x2.shape

    print("KERNEL_OK")
</pallas_src>

<mosaic_0001>
module attributes {stable_mosaic.version = 11 : i64} {
  func.func @_copy_kernel(%arg0: i32, %arg1: memref<8x256xf32, #tpu.memory_space<vmem>>, %arg2: memref<8x256xf32, #tpu.memory_space<vmem>>) attributes {dimension_semantics = [#tpu.dimension_semantics<parallel>], iteration_bounds = array<i64: 2>, scalar_prefetch = 0 : i64, scratch_operands = 0 : i64, tpu.core_type = #tpu.core_type<tc>, window_params = [{transform_indices = @transform_0, window_bounds = array<i64: 8, 256>}, {transform_indices = @transform_1, window_bounds = array<i64: 8, 256>}]} {
    %c0 = arith.constant 0 : index
    %c0_0 = arith.constant 0 : index
    %0 = vector.load %arg1[%c0, %c0_0] : memref<8x256xf32, #tpu.memory_space<vmem>>, vector<8x256xf32>
    %c0_1 = arith.constant 0 : index
    %c0_2 = arith.constant 0 : index
    %1 = vector.load %arg2[%c0_1, %c0_2] : memref<8x256xf32, #tpu.memory_space<vmem>>, vector<8x256xf32>
    tpu.vector_store %arg2[%c0_1, %c0_2], %0 {strides = array<i32>} : memref<8x256xf32, #tpu.memory_space<vmem>>, vector<8x256xf32>,
    return
  }
  func.func @transform_0(%arg0: i32) -> (i32, i32) {
    %c0_i32 = arith.constant 0 : i32
    %c0_i32_0 = arith.constant 0 : i32
    return %arg0, %c0_i32 : i32, i32
  }
  func.func @transform_1(%arg0: i32) -> (i32, i32) {
    %c0_i32 = arith.constant 0 : i32
    %c0_i32_0 = arith.constant 0 : i32
    return %arg0, %c0_i32 : i32, i32
  }
}

</mosaic_0001>

<llo_original>
// kernel: tpu_custom_call.1
$region0: #{tpu_custom_call.1}
  #allocation0 [shape = 'u32[]', space=smem, size = 0x4, offset = 0x4, fixed_abs, tag = 'smem constant byte address 0x4 - core index']
  #allocation1 [shape = 'u32[144,128]{1,0:T(1,128)}', space=vmem, size = 0x12000, scoped, tag = 'internal scratch']
  %s0 = inlined_call_operand.hbm [shape: f32[16,256], index: 0, kind: input, shape index: {}]
  %s1 = inlined_call_operand.hbm [shape: f32[16,256], index: 1, kind: output, shape index: {}]
  %s2 = sld [smem:[#allocation0]]
  $region41: #{tpu_custom_call.1} parent=0
    _
  %s4 = ssub.s32 1, %s2
  %s5 = scalar_select 0, %s4, %s2
  $region1: #{tpu_custom_call.1} parent=0
    #allocation2 [shape = 'u8[16384]{0}', space=vmem, size = 0x4000, scoped, tag = 'input window, operand 0']
    #allocation3 [shape = 's32[2]{0}', space=sflag, size = 0x8, scoped, tag = 'scoped memory for tpu_custom_call.1']
    #allocation4 [shape = 's32[2]{0}', space=sflag, size = 0x8, scoped, tag = 'scoped memory for tpu_custom_call.1']
    #allocation5 [shape = 'u8[16384]{0}', space=vmem, size = 0x4000, scoped, tag = 'output window, operand 0']
    %6 = vsyncpa [#allocation3], 0
    %s7 = scalar_lea.sflag [#allocation3], 1
    %8 = vsyncpa %s7, 0
    %9 = vsyncpa [#allocation4], 0
    %s10 = scalar_lea.sflag [#allocation4], 1
    %11 = vsyncpa %s10, 0
    loop: start=0, step=1, limit=4
    $region2: #{tpu_custom_call.1} parent=1 // loop_pre_header
      _
    $region3: #{tpu_custom_call.1} parent=1 // loop_header
      %s13 = sphi 0, %s17
      %p14 = scmp.ge.s32.totalorder %s13, 4
      %s23 = sphi 0, %s25
      %s26 = sphi 0, %s23
      %s27 = sphi 0, %s26
      %s43 = sphi 0, %s27
      %s49 = sphi 0, %s51
      %s52 = sphi 0, %s49
      %s53 = sphi 0, %s52
      %s69 = sphi 0, %s53
    $region4: #{tpu_custom_call.1} parent=1 // loop_header_branch
      %16 = sbr.rel (%p14) target = $region8
    $region5: #{tpu_custom_call.1} parent=1 // loop_body
      %s18 = ssub.s32 %s13, 1
      %s19 = ssub.s32 %s13, 2
      %s20 = sadd.s32 %s13, 1
      %s21 = ssub.s32 %s13, %s20
      %p22 = scmp.eq.s32.totalorder %s21, 0
      %s24 = sadd.s32 %s23, 1
      %s25 = scalar_select %p22, %s23, %s24
      %p28 = pneg %p22
      %p29 = scmp.eq.s32.totalorder %s13, 1
      %p30 = por %p28, %p29
      %p31 = scmp.ne.s32.totalorder %s23, %s26
      %p32 = scmp.eq.s32.totalorder %s13, 0
      %p33 = por %p31, %p32
      %p34 = scmp.ne.s32.totalorder %s23, %s26
      %p35 = scmp.eq.s32.totalorder %s18, 1
      %p36 = por %p34, %p35
      %p37 = scmp.ne.s32.totalorder %s26, %s27
      %p38 = scmp.eq.s32.totalorder %s18, 0
      %p39 = por %p37, %p38
      %p40 = scmp.ne.s32.totalorder %s26, %s27
      %p41 = scmp.eq.s32.totalorder %s19, 1
      %p42 = por %p40, %p41
      %p44 = scmp.ne.s32.totalorder %s27, %s43
      %p45 = scmp.eq.s32.totalorder %s19, 0
      %p46 = por %p44, %p45
      %s47 = ssub.s32 %s13, %s20
      %p48 = scmp.eq.s32.totalorder %s47, 0
      %s50 = sadd.s32 %s49, 1
      %s51 = scalar_select %p48, %s49, %s50
      %p54 = pneg %p48
      %p55 = scmp.eq.s32.totalorder %s13, 1
      %p56 = por %p54, %p55
      %p57 = scmp.ne.s32.totalorder %s49, %s52
      %p58 = scmp.eq.s32.totalorder %s13, 0
      %p59 = por %p57, %p58
      %p60 = scmp.ne.s32.totalorder %s49, %s52
      %p61 = scmp.eq.s32.totalorder %s18, 1
      %p62 = por %p60, %p61
      %p63 = scmp.ne.s32.totalorder %s52, %s53
      %p64 = scmp.eq.s32.totalorder %s18, 0
      %p65 = por %p63, %p64
      %p66 = scmp.ne.s32.totalorder %s52, %s53
      %p67 = scmp.eq.s32.totalorder %s19, 1
      %p68 = por %p66, %p67
      %p70 = scmp.ne.s32.totalorder %s53, %s69
      %p71 = scmp.eq.s32.totalorder %s19, 0
      %p72 = por %p70, %p71
      %p73 = scmp.le.s32.totalorder 1, %s13
      %p74 = scmp.lt.s32.totalorder %s13, 3
      %p75 = pnand %p73, %p74
      %p76 = pneg %p75
      // Predicated region
      $region9: #{tpu_custom_call.1} parent=5 // pred_check
        _
      $region10: #{tpu_custom_call.1} parent=5 // pred_check_branch
        %78 = sbr.rel (%p75) target = $region12
      $region11: #{tpu_custom_call.1} parent=5 // pred_region
        %s79 = ssub.s32 %s13, 1
      $region12: #{tpu_custom_call.1} parent=5 // pred_fallthru
        _
      %p80 = scmp.lt.s32.totalorder %s13, 2
      // Predicated region
      $region13: #{tpu_custom_call.1} parent=5 // pred_check
        %p81 = pneg %p80
      $region14: #{tpu_custom_call.1} parent=5 // pred_check_branch
        %83 = sbr.rel (%p81) target = $region16
      $region15: #{tpu_custom_call.1} parent=5 // pred_region
        // Predicated region
        $region17: #{tpu_custom_call.1} parent=15 // pred_check
          %p84 = pneg %p33
        $region18: #{tpu_custom_call.1} parent=15 // pred_check_branch
          %86 = sbr.rel (%p84) target = $region20
        $region19: #{tpu_custom_call.1} parent=15 // pred_region
          %s87 = sand.u32 %s23, 1
          %s88 = scalar_lea.sflag [#allocation3], %s87
          %s89 = sand.u32 %s23, 1
          %s90 = smul.addr %s89, 16
          %s91 = scalar_lea.vmem [#allocation2], %s90
          %s93 = ssub.s32 256, 256
          %94 = vsyncadd %s88, %s93
          %s95 = smul.addr %s13, 2
          %s96 = smul.addr %s95, 128
          %s97 = scalar_lea.hbm %s0, %s96
          %s99 = sshll.u32 %s91, 4
          %s100 = int_to_ptr.vmem [resolvable:$true] %s99
          %102 = dma.hbm_to_vmem [thread:$0]  %s97, 256, %s100, %s88
        $region20: #{tpu_custom_call.1} parent=15 // pred_fallthru
          _
      $region16: #{tpu_custom_call.1} parent=5 // pred_fallthru
        _
      %p103 = scmp.le.s32.totalorder 1, %s13
      %p104 = scmp.lt.s32.totalorder %s13, 3
      %p105 = pnand %p103, %p104
      %p106 = pneg %p105
      // Predicated region
      $region21: #{tpu_custom_call.1} parent=5 // pred_check
        _
      $region22: #{tpu_custom_call.1} parent=5 // pred_check_branch
        %108 = sbr.rel (%p105) target = $region24
      $region23: #{tpu_custom_call.1} parent=5 // pred_region
        %s109 = ssub.s32 %s13, 1
        %s110 = sand.u32 %s26, 1
        %s111 = scalar_lea.sflag [#allocation3], %s110
        %s112 = sand.u32 %s26, 1
        %s113 = smul.addr %s112, 16
        %s114 = scalar_lea.vmem [#allocation2], %s113
        // Predicated region
        $region25: #{tpu_custom_call.1} parent=23 // pred_check
          %p115 = pneg %p39
        $region26: #{tpu_custom_call.1} parent=23 // pred_check_branch
          %117 = sbr.rel (%p115) target = $region28
        $region27: #{tpu_custom_call.1} parent=23 // pred_region
          %118 = dma.done %s111, 256
        $region28: #{tpu_custom_call.1} parent=23 // pred_fallthru
          _
        %s119 = sand.u32 %s26, 1
        %s120 = scalar_lea.sflag [#allocation3], %s119
        %s121 = sand.u32 %s26, 1
        %s122 = smul.addr %s121, 16
        %s123 = scalar_lea.vmem [#allocation2], %s122
        %p124 = pneg %p39
        %p125 = pneg %p36
        %p126 = pneg %p65
        %p127 = pneg %p62
        %s128 = sand.u32 %s52, 1
        %s129 = scalar_lea.sflag [#allocation4], %s128
        %s130 = sand.u32 %s52, 1
        %s131 = smul.addr %s130, 16
        %s132 = scalar_lea.vmem [#allocation5], %s131
        %v133 = vld [vmem:[%s114] sm:$0xff]
        %v134 = vld [vmem:[%s114 + $0x8] sm:$0xff]
        %135 = vst [vmem:[%s132] sm:$0xff] %v133
        %136 = vst [vmem:[%s132 + $0x8] sm:$0xff] %v134
        %s137 = sand.u32 %s52, 1
        %s138 = scalar_lea.sflag [#allocation4], %s137
        %s139 = sand.u32 %s52, 1
        %s140 = smul.addr %s139, 16
        %s141 = scalar_lea.vmem [#allocation5], %s140
        // Predicated region
        $region29: #{tpu_custom_call.1} parent=23 // pred_check
          %p142 = pneg %p62
        $region30: #{tpu_custom_call.1} parent=23 // pred_check_branch
          %144 = sbr.rel (%p142) target = $region32
        $region31: #{tpu_custom_call.1} parent=23 // pred_region
          %s146 = ssub.s32 256, 256
          %147 = vsyncadd %s138, %s146
          %s148 = smul.addr %s18, 2
          %s149 = smul.addr %s148, 128
          %s150 = scalar_lea.hbm %s1, %s149
          %s152 = sshll.u32 %s141, 4
          %s153 = int_to_ptr.vmem [resolvable:$true] %s152
          %155 = dma.vmem_to_hbm [thread:$0]  %s153, 256, %s150, %s138
        $region32: #{tpu_custom_call.1} parent=23 // pred_fallthru
          _
      $region24: #{tpu_custom_call.1} parent=5 // pred_fallthru
        _
      %p156 = scmp.le.s32.totalorder 2, %s13
      // Predicated region
      $region33: #{tpu_custom_call.1} parent=5 // pred_check
        %p157 = pneg %p156
      $region34: #{tpu_custom_call.1} parent=5 // pred_check_branch
        %159 = sbr.rel (%p157) target = $region36
      $region35: #{tpu_custom_call.1} parent=5 // pred_region
        %s160 = ssub.s32 %s13, 2
        // Predicated region
        $region37: #{tpu_custom_call.1} parent=35 // pred_check
          %p161 = pneg %p68
        $region38: #{tpu_custom_call.1} parent=35 // pred_check_branch
          %163 = sbr.rel (%p161) target = $region40
        $region39: #{tpu_custom_call.1} parent=35 // pred_region
          %s164 = sand.u32 %s53, 1
          %s165 = scalar_lea.sflag [#allocation4], %s164
          %s166 = sand.u32 %s53, 1
          %s167 = smul.addr %s166, 16
          %s168 = scalar_lea.vmem [#allocation5], %s167
          %169 = dma.done %s165, 256
        $region40: #{tpu_custom_call.1} parent=35 // pred_fallthru
          _
      $region36: #{tpu_custom_call.1} parent=5 // pred_fallthru
        _
    $region6: #{tpu_custom_call.1} parent=1 // loop_footer
      %s17 = sadd.s32 1, %s13
    $region7: #{tpu_custom_call.1} parent=1 // loop_footer_branch
      %12 = sbr.rel target = $region3
    $region8: #{tpu_custom_call.1} parent=1 // loop_exit
      _
    %170 = vsyncpa [#allocation3], 1
    %s171 = scalar_lea.sflag [#allocation3], 1
    %172 = vsyncpa %s171, 1
    %173 = vsyncpa [#allocation4], 1
    %s174 = scalar_lea.sflag [#allocation4], 1
    %175 = vsyncpa %s174, 1

</llo_original>
